<compile_context>
chip_gen: v6e
topology: v6e:2x2x1
jax: 0.10.0
libtpu: 0.0.40
codegen_flags: <defaults>
</compile_context>

<pallas_src>
import functools
import math

import jax
import jax.numpy as jnp
from jax.experimental import pallas as pl
from jax.experimental.pallas import tpu as pltpu

_EPS = 1e-12                 # F.normalize eps
_STATIC_MAX_SCALE = 44.0     # exp(sim - scale) cannot under/overflow below this


# --------------------------------------------------------------------------- #
# Kernels
# --------------------------------------------------------------------------- #
def _infonce_kernel_static(a_ref, b_ref, row_lse_ref, csum_ref, rsum_ref, *,
                           scale, tm, tn, n_valid, padded, use_mxu_colsum):
    """Fast path (scale <= 44): static softmax shift == scale.

    Inputs are pre-normalized / pre-scaled bf16; the NxN similarity matrix is
    never materialized.  The per-row sum-exp accumulates in VMEM scratch across
    the column sweep; per-(row-tile, column-tile) column sum-exps stream out
    and are combined in a tiny JAX epilogue (keeps the row axis parallel)."""
    i = pl.program_id(0)          # row tile of a          ("parallel")
    j = pl.program_id(1)          # row tile of b == col   ("arbitrary", last)
    nj = pl.num_programs(1)

    @pl.when(j == 0)
    def _():
        rsum_ref[...] = jnp.zeros(rsum_ref.shape, jnp.float32)

    # (tm, tn) similarity tile on the MXU: bf16 operands, f32 accumulation,
    # contraction over D (no transpose / relayout of b).
    sim = jax.lax.dot_general(a_ref[...], b_ref[...], (((1,), (1,)), ((), ())),
                              preferred_element_type=jnp.float32)

    # |sim| <= scale (unit-norm rows, a pre-scaled by `scale`), so `scale` is a
    # valid static softmax shift: no online max, no cmax output stream.
    p = jnp.exp(sim - scale)

    if padded:
        row_ids = i * tm + jax.lax.broadcasted_iota(jnp.int32, (tm, tn), 0)
        col_ids = j * tn + jax.lax.broadcasted_iota(jnp.int32, (tm, tn), 1)
        p = jnp.where((row_ids < n_valid) & (col_ids < n_valid), p, 0.0)

    rsum_ref[...] += jnp.sum(p, axis=-1, keepdims=True)

    if use_mxu_colsum:
        # Small D: the MXU is mostly idle, so do the cross-sublane column
        # reduction there instead of on the VPU/XLU epilogue slots.
        ones = jnp.ones((1, tm), dtype=jnp.float32)
        c_sum = jax.lax.dot_general(ones, p, (((1,), (0,)), ((), ())),
                                    preferred_element_type=jnp.float32)
    else:
        c_sum = jnp.sum(p, axis=0, keepdims=True)
    csum_ref[...] = c_sum.reshape(csum_ref.shape)

    @pl.when(j == nj - 1)
    def _():
        # TODO(synk): emit lane-dense (1, tm) instead of (tm, 1) to avoid the
        # masked single-lane stores (tiny: happens once per row sweep).
        row_lse_ref[...] = jnp.log(rsum_ref[...]) + scale


def _infonce_kernel_online(a_ref, b_ref, row_lse_ref, cmax_ref, csum_ref,
                           rmax_ref, rsum_ref, *, tm, tn, n_valid, padded):
    """Fallback (scale > 44, i.e. temperature < ~0.023): online row max plus
    per-tile column max / sum-exp streams, numerically safe up to scale=100."""
    i = pl.program_id(0)
    j = pl.program_id(1)
    nj = pl.num_programs(1)

    @pl.when(j == 0)
    def _():
        rmax_ref[...] = jnp.full(rmax_ref.shape, -jnp.inf, jnp.float32)
        rsum_ref[...] = jnp.zeros(rsum_ref.shape, jnp.float32)

    sim = jax.lax.dot_general(a_ref[...], b_ref[...], (((1,), (1,)), ((), ())),
                              preferred_element_type=jnp.float32)

    m_old = rmax_ref[...]
    m_new = jnp.maximum(m_old, jnp.max(sim, axis=-1, keepdims=True))   # (tm, 1)
    c_max = jnp.max(sim, axis=0, keepdims=True)                        # (1, tn)
    p_row = jnp.exp(sim - m_new)
    p_col = jnp.exp(sim - c_max)

    if padded:
        row_ids = i * tm + jax.lax.broadcasted_iota(jnp.int32, (tm, tn), 0)
        col_ids = j * tn + jax.lax.broadcasted_iota(jnp.int32, (tm, tn), 1)
        valid = (row_ids < n_valid) & (col_ids < n_valid)
        p_row = jnp.where(valid, p_row, 0.0)
        p_col = jnp.where(valid, p_col, 0.0)

    rsum_ref[...] = rsum_ref[...] * jnp.exp(m_old - m_new) \
        + jnp.sum(p_row, axis=-1, keepdims=True)
    rmax_ref[...] = m_new
    cmax_ref[...] = c_max.reshape(cmax_ref.shape)
    csum_ref[...] = jnp.sum(p_col, axis=0, keepdims=True).reshape(csum_ref.shape)

    @pl.when(j == nj - 1)
    def _():
        row_lse_ref[...] = jnp.log(rsum_ref[...]) + rmax_ref[...]


# --------------------------------------------------------------------------- #
# Tile / VMEM-budget selection
# --------------------------------------------------------------------------- #
def _vmem_limit_bytes():
    """Generation-aware scoped VMEM limit (v5e/v6e: 128 MiB physical, v7x: 64)."""
    try:
        cap = pltpu.get_tpu_info().vmem_capacity_bytes
    except Exception:                       # unknown backend: be conservative
        cap = 64 * 1024 * 1024
    if cap >= 128 * 1024 * 1024:
        return 100 * 1024 * 1024            # v5e / v6e: raise well past 40 MiB
    return int(min(48 * 1024 * 1024, (cap * 3) // 4))   # v7x and unknowns


def _choose_tiles(n_pad, d, budget_bytes):
    """Pick (tm, tn).  Total b HBM traffic scales with n_pad/tm, so tm grows to
    fill the VMEM budget while tn stays <= 512; keep >= 2 row tiles so the
    "parallel" axis can split across v7x's two TensorCores."""
    if n_pad <= 256:
        return n_pad, n_pad                 # trivially small: one full tile
    cands = [t for t in range(128, n_pad + 1, 128) if n_pad % t == 0]
    tn = max(t for t in cands if t <= 512)
    # bytes ~= 4*tm*d (a, double-buffered bf16) + 4*tn*d (b, double-buffered
    # bf16) + 8*tm*tn (f32 sim + p intermediates the BlockSpec accounting
    # doesn't see).
    tm_cap = (budget_bytes - 4 * tn * d) // (4 * d + 8 * tn)
    tm_cap = min(tm_cap, n_pad // 2)
    tm_cands = [t for t in cands if t <= tm_cap]
    tm = max(tm_cands) if tm_cands else 128
    return tm, tn


# --------------------------------------------------------------------------- #
# Wrapper
# --------------------------------------------------------------------------- #
def infonce_loss_pallas(a, b, *, temperature=0.07, max_scale=100.0,
                        loss_weight=1.0, matmul_dtype=jnp.bfloat16,
                        tm=None, tn=None):
    """Forward pass of InfoNCELoss (learnable=False, dist=False, weight=None)."""
    assert a.ndim == 2 and a.shape == b.shape
    n, d = a.shape
    # scale = exp(log(1/temperature)).clamp(max=max_scale) -- compile-time const.
    scale = min(math.exp(math.log(1.0 / temperature)), float(max_scale))

    # Prologue (plain XLA, O(n*d)): normalize, fold in the temperature scale,
    # cast to bf16 once.  The b operand is re-streamed n_pad/tm times by the
    # kernel, so this halves the dominant HBM stream and removes all per-step
    # normalization work from the kernel.
    a32 = a.astype(jnp.float32)
    b32 = b.astype(jnp.float32)
    a_n = a32 * jax.lax.rsqrt(
        jnp.maximum(jnp.sum(a32 * a32, axis=-1, keepdims=True), _EPS * _EPS))
    b_n = b32 * jax.lax.rsqrt(
        jnp.maximum(jnp.sum(b32 * b32, axis=-1, keepdims=True), _EPS * _EPS))
    a_s = (a_n * scale).astype(matmul_dtype)
    b_q = b_n.astype(matmul_dtype)

    # Diagonal logits from the same quantized operands (O(n*d)); doing it here
    # lets the kernel use rectangular (tm != tn) tiles with no diag bookkeeping.
    diag = jnp.sum(a_s.astype(jnp.float32) * b_q.astype(jnp.float32), axis=-1)

    # Pad n to a multiple of 128 when needed so the kernel always gets
    # hardware-aligned tiles; padded rows/cols are masked out of the stats.
    n_pad = ((n + 127) // 128) * 128 if (n > 256 and n % 128 != 0) else n
    padded = n_pad != n
    if padded:
        a_s = jnp.pad(a_s, ((0, n_pad - n), (0, 0)))
        b_q = jnp.pad(b_q, ((0, n_pad - n), (0, 0)))

    vmem_limit = _vmem_limit_bytes()
    auto_tm, auto_tn = _choose_tiles(n_pad, d, vmem_limit // 2)
    tm = auto_tm if tm is None else tm
    tn = auto_tn if tn is None else tn
    assert n_pad % tm == 0 and n_pad % tn == 0, (n_pad, tm, tn)
    nt_i, nt_j = n_pad // tm, n_pad // tn

    use_static_max = scale <= _STATIC_MAX_SCALE
    use_mxu_colsum = (d <= 96) and (tm >= 128)

    in_specs = [
        # `a` row tile stays resident across the whole column sweep.
        pl.BlockSpec((tm, d), lambda i, j: (i, 0)),
        # TODO(synk): pipeline_mode=pl.Buffered(3) here if profiling on v5e
        # shows the b DMA exposed at small D.
        pl.BlockSpec((tn, d), lambda i, j: (j, 0)),
    ]
    row_lse_shape = jax.ShapeDtypeStruct((n_pad, 1), jnp.float32)
    row_lse_spec = pl.BlockSpec((tm, 1), lambda i, j: (i, 0))
    colstat_shape = jax.ShapeDtypeStruct((nt_i, 1, n_pad), jnp.float32)
    colstat_spec = pl.BlockSpec((1, 1, tn), lambda i, j: (i, 0, j))
    compiler_params = pltpu.CompilerParams(
        dimension_semantics=("parallel", "arbitrary"),
        vmem_limit_bytes=int(vmem_limit))

    if use_static_max:
        kernel = functools.partial(
            _infonce_kernel_static, scale=scale, tm=tm, tn=tn, n_valid=n,
            padded=padded, use_mxu_colsum=use_mxu_colsum)
        row_lse, csum = pl.pallas_call(
            kernel,
            out_shape=(row_lse_shape, colstat_shape),
            grid=(nt_i, nt_j),
            in_specs=in_specs,
            out_specs=(row_lse_spec, colstat_spec),
            scratch_shapes=[pltpu.VMEM((tm, 1), jnp.float32)],   # running row sum-exp
            compiler_params=compiler_params,
        )(a_s, b_q)
        col_lse = jnp.log(jnp.sum(csum.reshape(nt_i, n_pad), axis=0)) + scale
    else:
        kernel = functools.partial(
            _infonce_kernel_online, tm=tm, tn=tn, n_valid=n, padded=padded)
        row_lse, cmax, csum = pl.pallas_call(
            kernel,
            out_shape=(row_lse_shape, colstat_shape, colstat_shape),
            grid=(nt_i, nt_j),
            in_specs=in_specs,
            out_specs=(row_lse_spec, colstat_spec, colstat_spec),
            scratch_shapes=[pltpu.VMEM((tm, 1), jnp.float32),    # running row max
                            pltpu.VMEM((tm, 1), jnp.float32)],   # running row sum-exp
            compiler_params=compiler_params,
        )(a_s, b_q)
        cmax = cmax.reshape(nt_i, n_pad)
        csum = csum.reshape(nt_i, n_pad)
        col_m = jnp.max(cmax, axis=0)
        col_lse = jnp.log(jnp.sum(csum * jnp.exp(cmax - col_m[None, :]), axis=0)) + col_m

    row_lse = row_lse[:n, 0]
    col_lse = col_lse[:n]
    a_loss = jnp.mean(row_lse - diag)
    b_loss = jnp.mean(col_lse - diag)
    return (a_loss + b_loss) * 0.5 * loss_weight


# --------------------------------------------------------------------------- #
# Pure-JAX reference
# --------------------------------------------------------------------------- #
def _infonce_loss_ref(a, b, *, temperature=0.07, max_scale=100.0,
                      loss_weight=1.0, matmul_dtype=None):
    """matmul_dtype=None: full f32 (PyTorch semantics); jnp.bfloat16 mirrors
    the kernel's bf16 MXU operands."""
    a = a.astype(jnp.float32)
    b = b.astype(jnp.float32)
    scale = min(math.exp(math.log(1.0 / temperature)), float(max_scale))
    a_n = a / jnp.maximum(jnp.sqrt(jnp.sum(a * a, axis=-1, keepdims=True)), _EPS)
    b_n = b / jnp.maximum(jnp.sqrt(jnp.sum(b * b, axis=-1, keepdims=True)), _EPS)
    a_s, b_q = a_n * scale, b_n
    if matmul_dtype is not None:
        a_s, b_q = a_s.astype(matmul_dtype), b_q.astype(matmul_dtype)
    sim = jnp.dot(a_s, b_q.T, preferred_element_type=jnp.float32)
    n = a.shape[0]
    idx = jnp.arange(n)
    diag = sim[idx, idx]
    lse_r = jax.scipy.special.logsumexp(sim, axis=-1)
    lse_c = jax.scipy.special.logsumexp(sim, axis=0)
    return (jnp.mean(lse_r - diag) + jnp.mean(lse_c - diag)) * 0.5 * loss_weight


if __name__ == "__main__":
    key = jax.random.PRNGKey(0)
    keys = jax.random.split(key, 6)

    # Case 1: tiny single-tile path (N=8, D=32), default temperature.
    a1 = jax.random.normal(keys[0], (8, 32), dtype=jnp.float32)
    b1 = jax.random.normal(keys[1], (8, 32), dtype=jnp.float32)
    l1 = jax.block_until_ready(infonce_loss_pallas(a1, b1))
    r1_bf16 = _infonce_loss_ref(a1, b1, matmul_dtype=jnp.bfloat16)
    r1_f32 = _infonce_loss_ref(a1, b1)
    assert jnp.allclose(l1, r1_bf16, atol=3e-3, rtol=3e-3), (l1, r1_bf16)
    assert jnp.allclose(l1, r1_f32, atol=2e-2, rtol=2e-2), (l1, r1_f32)

    # Case 2: multi-tile grid + MXU column-sum path (N=256, D=32, tm=tn=128).
    a2 = jax.random.normal(keys[2], (256, 32), dtype=jnp.float32)
    b2 = jax.random.normal(keys[3], (256, 32), dtype=jnp.float32)
    l2 = jax.block_until_ready(infonce_loss_pallas(a2, b2, tm=128, tn=128))
    r2_bf16 = _infonce_loss_ref(a2, b2, matmul_dtype=jnp.bfloat16)
    r2_f32 = _infonce_loss_ref(a2, b2)
    assert jnp.allclose(l2, r2_bf16, atol=3e-3, rtol=3e-3), (l2, r2_bf16)
    assert jnp.allclose(l2, r2_f32, atol=2e-2, rtol=2e-2), (l2, r2_f32)

    # Case 3: N not a multiple of 128 -> padded + masked tiled path (N=600).
    a3 = jax.random.normal(keys[4], (600, 32), dtype=jnp.float32)
    b3 = jax.random.normal(keys[5], (600, 32), dtype=jnp.float32)
    l3 = jax.block_until_ready(infonce_loss_pallas(a3, b3))
    r3_bf16 = _infonce_loss_ref(a3, b3, matmul_dtype=jnp.bfloat16)
    r3_f32 = _infonce_loss_ref(a3, b3)
    assert jnp.allclose(l3, r3_bf16, atol=3e-3, rtol=3e-3), (l3, r3_bf16)
    assert jnp.allclose(l3, r3_f32, atol=2e-2, rtol=2e-2), (l3, r3_f32)

    # Case 4: very small temperature (scale clamped to 100) -> online fallback.
    l4 = jax.block_until_ready(
        infonce_loss_pallas(a2, b2, temperature=0.005, tm=128, tn=128))
    r4 = _infonce_loss_ref(a2, b2, temperature=0.005, matmul_dtype=jnp.bfloat16)
    assert jnp.allclose(l4, r4, atol=5e-3, rtol=5e-3), (l4, r4)

    print("KERNEL_OK")
</pallas_src>

<mosaic_0001>
module attributes {stable_mosaic.version = 11 : i64} {
  func.func @_infonce_kernel_static(%arg0: i32, %arg1: i32, %arg2: memref<8x32xbf16, #tpu.memory_space<vmem>>, %arg3: memref<8x32xbf16, #tpu.memory_space<vmem>>, %arg4: memref<8x1xf32, #tpu.memory_space<vmem>>, %arg5: memref<1x1x8xf32, #tpu.memory_space<vmem>>, %arg6: memref<8x1xf32, #tpu.memory_space<vmem>>) attributes {dimension_semantics = [#tpu.dimension_semantics<parallel>, #tpu.dimension_semantics<arbitrary>], iteration_bounds = array<i64: 1, 1>, scalar_prefetch = 0 : i64, scratch_operands = 1 : i64, tpu.core_type = #tpu.core_type<tc>, window_params = [{transform_indices = @transform_0, window_bounds = array<i64: 8, 32>}, {transform_indices = @transform_1, window_bounds = array<i64: 8, 32>}, {transform_indices = @transform_2, window_bounds = array<i64: 8, 1>}, {transform_indices = @transform_3, window_bounds = array<i64: 1, 1, 8>}]} {
    %c0_i32 = arith.constant 0 : i32
    %0 = arith.cmpi eq, %arg1, %c0_i32 : i32
    %1 = arith.extui %0 : i1 to i32
    %c0_i32_0 = arith.constant 0 : i32
    %2 = arith.cmpi ne, %1, %c0_i32_0 : i32
    scf.if %2 {
      %cst_16 = arith.constant 0.000000e+00 : f32
      %21 = vector.broadcast %cst_16 : f32 to vector<8x1xf32>
      %c0_17 = arith.constant 0 : index
      %c0_18 = arith.constant 0 : index
      %22 = vector.load %arg6[%c0_17, %c0_18] : memref<8x1xf32, #tpu.memory_space<vmem>>, vector<8x1xf32>
      tpu.vector_store %arg6[%c0_17, %c0_18], %21 {strides = array<i32>} : memref<8x1xf32, #tpu.memory_space<vmem>>, vector<8x1xf32>,
    } else {
    }
    %c0 = arith.constant 0 : index
    %c0_1 = arith.constant 0 : index
    %3 = vector.load %arg2[%c0, %c0_1] : memref<8x32xbf16, #tpu.memory_space<vmem>>, vector<8x32xbf16>
    %c0_2 = arith.constant 0 : index
    %c0_3 = arith.constant 0 : index
    %4 = vector.load %arg3[%c0_2, %c0_3] : memref<8x32xbf16, #tpu.memory_space<vmem>>, vector<8x32xbf16>
    %cst = arith.constant dense<0.000000e+00> : vector<8x8xf32>
    %5 = tpu.matmul %3, %4, %cst {dimension_numbers = #tpu.dot_dimension_numbers<[1], [1], [0], [0], [0, 0, 1, 0], [], []>} : vector<8x32xbf16>, vector<8x32xbf16>, vector<8x8xf32> -> vector<8x8xf32>
    %cst_4 = arith.constant 14.2857141 : f32
    %6 = vector.broadcast %cst_4 : f32 to vector<8x8xf32>
    %7 = arith.subf %5, %6 : vector<8x8xf32>
    %8 = math.exp %7 : vector<8x8xf32>
    %c0_5 = arith.constant 0 : index
    %c0_6 = arith.constant 0 : index
    %9 = vector.load %arg6[%c0_5, %c0_6] : memref<8x1xf32, #tpu.memory_space<vmem>>, vector<8x1xf32>
    %cst_7 = arith.constant dense<0.000000e+00> : vector<8xf32>
    %10 = vector.multi_reduction <add>, %8, %cst_7 [1] : vector<8x8xf32> to vector<8xf32>
    %11 = vector.shape_cast %10 : vector<8xf32> to vector<8x1xf32>
    %12 = arith.addf %9, %11 : vector<8x1xf32>
    %c0_8 = arith.constant 0 : index
    %c0_9 = arith.constant 0 : index
    %13 = vector.load %arg6[%c0_8, %c0_9] : memref<8x1xf32, #tpu.memory_space<vmem>>, vector<8x1xf32>
    tpu.vector_store %arg6[%c0_8, %c0_9], %12 {strides = array<i32>} : memref<8x1xf32, #tpu.memory_space<vmem>>, vector<8x1xf32>,
    %cst_10 = arith.constant dense<0.000000e+00> : vector<8xf32>
    %14 = vector.multi_reduction <add>, %8, %cst_10 [0] : vector<8x8xf32> to vector<8xf32>
    %15 = vector.shape_cast %14 : vector<8xf32> to vector<1x8xf32>
    %16 = vector.shape_cast %15 : vector<1x8xf32> to vector<1x1x8xf32>
    %c0_11 = arith.constant 0 : index
    %c0_12 = arith.constant 0 : index
    %c0_13 = arith.constant 0 : index
    %17 = vector.load %arg5[%c0_11, %c0_12, %c0_13] : memref<1x1x8xf32, #tpu.memory_space<vmem>>, vector<1x1x8xf32>
    tpu.vector_store %arg5[%c0_11, %c0_12, %c0_13], %16 {strides = array<i32>} : memref<1x1x8xf32, #tpu.memory_space<vmem>>, vector<1x1x8xf32>,
    %c0_i32_14 = arith.constant 0 : i32
    %18 = arith.cmpi eq, %arg1, %c0_i32_14 : i32
    %19 = arith.extui %18 : i1 to i32
    %c0_i32_15 = arith.constant 0 : i32
    %20 = arith.cmpi ne, %19, %c0_i32_15 : i32
    scf.if %20 {
      %c0_16 = arith.constant 0 : index
      %c0_17 = arith.constant 0 : index
      %21 = vector.load %arg6[%c0_16, %c0_17] : memref<8x1xf32, #tpu.memory_space<vmem>>, vector<8x1xf32>
      %22 = math.log %21 : vector<8x1xf32>
      %cst_18 = arith.constant 14.2857141 : f32
      %23 = vector.broadcast %cst_18 : f32 to vector<8x1xf32>
      %24 = arith.addf %22, %23 : vector<8x1xf32>
      %c0_19 = arith.constant 0 : index
      %c0_20 = arith.constant 0 : index
      %25 = vector.load %arg4[%c0_19, %c0_20] : memref<8x1xf32, #tpu.memory_space<vmem>>, vector<8x1xf32>
      tpu.vector_store %arg4[%c0_19, %c0_20], %24 {strides = array<i32>} : memref<8x1xf32, #tpu.memory_space<vmem>>, vector<8x1xf32>,
    } else {
    }
    return
  }
  func.func @transform_0(%arg0: i32, %arg1: i32) -> (i32, i32) {
    %c0_i32 = arith.constant 0 : i32
    %c0_i32_0 = arith.constant 0 : i32
    return %arg0, %c0_i32 : i32, i32
  }
  func.func @transform_1(%arg0: i32, %arg1: i32) -> (i32, i32) {
    %c0_i32 = arith.constant 0 : i32
    %c0_i32_0 = arith.constant 0 : i32
    return %arg1, %c0_i32 : i32, i32
  }
  func.func @transform_2(%arg0: i32, %arg1: i32) -> (i32, i32) {
    %c0_i32 = arith.constant 0 : i32
    %c0_i32_0 = arith.constant 0 : i32
    return %arg0, %c0_i32 : i32, i32
  }
  func.func @transform_3(%arg0: i32, %arg1: i32) -> (i32, i32, i32) {
    %c0_i32 = arith.constant 0 : i32
    %c0_i32_0 = arith.constant 0 : i32
    return %arg0, %c0_i32, %arg1 : i32, i32, i32
  }
}

</mosaic_0001>

<llo_original>
// kernel: tpu_custom_call.1
$region0: #{tpu_custom_call.1}
  #allocation0 [shape = 'u32[]', space=smem, size = 0x4, offset = 0x4, fixed_abs, tag = 'smem constant byte address 0x4 - core index']
  #allocation1 [shape = 'u32[144,128]{1,0:T(1,128)}', space=vmem, size = 0x12000, scoped, tag = 'internal scratch']
  #allocation2 [shape = 'f32[8,1]{1,0:T(8,128)}', space=vmem, size = 0x1000, scoped, tag = 'scratch operand']
  %s0 = inlined_call_operand.hbm [shape: bf16[8,32], index: 0, kind: input, shape index: {}]
  %s1 = inlined_call_operand.hbm [shape: bf16[8,32], index: 1, kind: input, shape index: {}]
  %s2 = inlined_call_operand.vmem [shape: f32[8,1], index: 2, kind: output, shape index: {0}]
  %s3 = inlined_call_operand.hbm [shape: f32[1,1,8], index: 3, kind: output, shape index: {1}]
  %4 = xla_tuple %s2, %s3
  %s5 = sld [smem:[#allocation0]]
  $region42: #{tpu_custom_call.1} parent=0
    _
  %s7 = ssub.s32 1, %s5
  %s8 = scalar_select 0, %s7, %s5
  $region1: #{tpu_custom_call.1} parent=0
    #allocation3 [shape = 'u8[2048]{0}', space=vmem, size = 0x800, scoped, tag = 'input window, operand 0, single buffered']
    #allocation4 [shape = 's32[1]{0}', space=sflag, size = 0x4, scoped, tag = 'scoped memory for tpu_custom_call.1']
    #allocation5 [shape = 's32[1]{0}', space=sflag, size = 0x4, scoped, tag = 'scoped memory for tpu_custom_call.1']
    #allocation6 [shape = 'u8[2048]{0}', space=vmem, size = 0x800, scoped, tag = 'input window, operand 1, single buffered']
    #allocation7 [shape = 's32[1]{0}', space=sflag, size = 0x4, scoped, tag = 'scoped memory for tpu_custom_call.1']
    #allocation8 [shape = 'u8[512]{0}', space=vmem, size = 0x400, scoped, tag = 'output window, operand 1, single buffered']
    %9 = vsyncpa [#allocation4], 0
    %10 = vsyncpa [#allocation7], 0
    %11 = vsyncpa [#allocation5], 0
    // Predicated region
    $region2: #{tpu_custom_call.1} parent=1 // pred_check
      _
    $region3: #{tpu_custom_call.1} parent=1 // pred_check_branch
      %13 = sbr.rel (0) target = $region5
    $region4: #{tpu_custom_call.1} parent=1 // pred_region
      %s15 = ssub.s32 64, 64
      %16 = vsyncadd [#allocation4], %s15
      %s18 = sshll.u32 [#allocation3], 4
      %s19 = int_to_ptr.vmem [resolvable:$true] %s18
      %21 = dma.hbm_to_vmem [thread:$0]  %s0, 64, %s19, [#allocation4]
    $region5: #{tpu_custom_call.1} parent=1 // pred_fallthru
      _
    // Predicated region
    $region6: #{tpu_custom_call.1} parent=1 // pred_check
      _
    $region7: #{tpu_custom_call.1} parent=1 // pred_check_branch
      %23 = sbr.rel (0) target = $region9
    $region8: #{tpu_custom_call.1} parent=1 // pred_region
      %s25 = ssub.s32 64, 64
      %26 = vsyncadd [#allocation7], %s25
      %s28 = sshll.u32 [#allocation6], 4
      %s29 = int_to_ptr.vmem [resolvable:$true] %s28
      %31 = dma.hbm_to_vmem [thread:$0]  %s1, 64, %s29, [#allocation7]
    $region9: #{tpu_custom_call.1} parent=1 // pred_fallthru
      _
    // Predicated region
    $region10: #{tpu_custom_call.1} parent=1 // pred_check
      _
    $region11: #{tpu_custom_call.1} parent=1 // pred_check_branch
      %33 = sbr.rel (0) target = $region13
    $region12: #{tpu_custom_call.1} parent=1 // pred_region
      %34 = dma.done [#allocation4], 64
    $region13: #{tpu_custom_call.1} parent=1 // pred_fallthru
      _
    // Predicated region
    $region14: #{tpu_custom_call.1} parent=1 // pred_check
      _
    $region15: #{tpu_custom_call.1} parent=1 // pred_check_branch
      %36 = sbr.rel (0) target = $region17
    $region16: #{tpu_custom_call.1} parent=1 // pred_region
      %37 = dma.done [#allocation7], 64
    $region17: #{tpu_custom_call.1} parent=1 // pred_fallthru
      _
    %p39 = scmp.eq.s32.totalorder 0, 0
    // Predicated region
    $region18: #{tpu_custom_call.1} parent=1 // pred_check
      %p40 = pneg %p39
    $region19: #{tpu_custom_call.1} parent=1 // pred_check_branch
      %42 = sbr.rel (%p40) target = $region21
    $region20: #{tpu_custom_call.1} parent=1 // pred_region
      %vm43 = vcmask 7168
      %44 = vst.msk [vmem:[#allocation2] sm:$0xff] %vm43, 0.0
    $region21: #{tpu_custom_call.1} parent=1 // pred_fallthru
      _
    %v45 = vld [vmem:[#allocation3] sm:$0xf]
    %v46 = vld [vmem:[#allocation6] sm:$0xf]
    %vm47 = vcmask 261120
    %v49 = vsel %vm47, %v45, 0
    %v52 = vsel %vm47, %v46, 0
    %54 = vmatprep.subr.bf16.mxu0 0
    %55 = vmatpush1.bf16.xpose.msra.mxu0 0
    %56 = vmatprep.subr.bf16.mxu0 0
    %57 = vmatpush1.bf16.xpose.msra.mxu0 0
    %58 = vmatprep.subr.bf16.mxu0 0
    %59 = vmatpush1.bf16.xpose.msra.mxu0 0
    %60 = vmatprep.subr.bf16.mxu0 0
    %61 = vmatpush1.bf16.xpose.msra.mxu0 0
    %62 = vmatprep.subr.bf16.mxu0 0
    %63 = vmatpush1.bf16.xpose.msra.mxu0 0
    %64 = vmatprep.subr.bf16.mxu0 0
    %65 = vmatpush1.bf16.xpose.msra.mxu0 0
    %66 = vmatprep.subr.bf16.mxu0 0
    %67 = vmatpush1.bf16.xpose.msra.mxu0 0
    %68 = vmatprep.subr.bf16.mxu0 0
    %69 = vmatpush1.bf16.xpose.msra.mxu0 %v52
    %70 = vmatprep.subr.bf16.mxu0 0
    %71 = vmatpush2.bf16.xpose.msra.mxu0 0
    %72 = vmatprep.subr.bf16.mxu0 0
    %73 = vmatpush2.bf16.xpose.msra.mxu0 0
    %74 = vmatprep.subr.bf16.mxu0 0
    %75 = vmatpush2.bf16.xpose.msra.mxu0 0
    %76 = vmatprep.subr.bf16.mxu0 0
    %77 = vmatpush2.bf16.xpose.msra.mxu0 0
    %78 = vmatprep.subr.bf16.mxu0 0
    %79 = vmatpush2.bf16.xpose.msra.mxu0 0
    %80 = vmatprep.subr.bf16.mxu0 0
    %81 = vmatpush2.bf16.xpose.msra.mxu0 0
    %82 = vmatprep.subr.bf16.mxu0 0
    %83 = vmatpush2.bf16.xpose.msra.mxu0 0
    %84 = vmatprep.subr.bf16.mxu0 0
    %85 = vmatpush2.bf16.xpose.msra.mxu0 0
    %86 = vmatprep.mubr.bf16.mxu0 0
    %87 = vmatmul.mubr.bf16.gmra.mxu0 %v49
    %v88 = vpop.f32.mrf.mxu0
    %v89 = vadd.f32 0.0, %v88
    %v90 = vpop.f32.mrf.mxu0
    %v91 = vpop.f32.mrf.mxu0
    %v92 = vpop.f32.mrf.mxu0
    %93 = vdwg.mxu0
    %v94 = vsub.f32 %v89, 14.285714
    %v95 = vmul.f32 %v94, 1.442695
    %v96 = vpow.pop %v95
    %v97 = vld [vmem:[#allocation2] sm:$0xff]
    %vm98 = vcmask 64512
    %v99 = vsel %vm98, %v96, 0.0
    %100 = vadd.xlane.f32.xlu0 %v99
    %v101 = vpop.xlane.xlu0 %100
    %v102 = vadd.f32 %v97, %v101
    %vm103 = vcmask 7168
    %104 = vst.msk [vmem:[#allocation2] sm:$0xff] %vm103, %v102
    %v105 = vrot.slane %v99, 4
    %v106 = vadd.f32 %v99, %v105
    %v107 = vrot.slane %v106, 2
    %v108 = vadd.f32 %v106, %v107
    %v109 = vrot.slane %v108, 1
    %v110 = vadd.f32 %v108, %v109
    %vm111 = vcmask 57344
    %112 = vst.msk [vmem:[#allocation8] sm:$0x1] %vm111, %v110
    // Predicated region
    $region22: #{tpu_custom_call.1} parent=1 // pred_check
      %p113 = pneg %p39
    $region23: #{tpu_custom_call.1} parent=1 // pred_check_branch
      %115 = sbr.rel (%p113) target = $region25
    $region24: #{tpu_custom_call.1} parent=1 // pred_region
      %v116 = vld [vmem:[#allocation2] sm:$0xff]
      %v117 = vlog2.pop %v116
      %v118 = vmul.f32 %v117, 0.6931472
      %v119 = vadd.f32 %v118, 14.285714
      %120 = vst.msk [vmem:[%s2] sm:$0xff] %vm103, %v119
    $region25: #{tpu_custom_call.1} parent=1 // pred_fallthru
      _
    // Predicated region
    $region26: #{tpu_custom_call.1} parent=1 // pred_check
      _
    $region27: #{tpu_custom_call.1} parent=1 // pred_check_branch
      %122 = sbr.rel (0) target = $region29
    $region28: #{tpu_custom_call.1} parent=1 // pred_region
      _
    $region29: #{tpu_custom_call.1} parent=1 // pred_fallthru
      _
    // Predicated region
    $region30: #{tpu_custom_call.1} parent=1 // pred_check
      _
    $region31: #{tpu_custom_call.1} parent=1 // pred_check_branch
      %124 = sbr.rel (0) target = $region33
    $region32: #{tpu_custom_call.1} parent=1 // pred_region
      %s126 = ssub.s32 16, 16
      %127 = vsyncadd [#allocation5], %s126
      %s129 = sshll.u32 [#allocation8], 4
      %s130 = int_to_ptr.vmem [resolvable:$true] %s129
      %132 = dma.vmem_to_hbm [thread:$0]  %s130, 16, %s3, [#allocation5]
    $region33: #{tpu_custom_call.1} parent=1 // pred_fallthru
      _
    // Predicated region
    $region34: #{tpu_custom_call.1} parent=1 // pred_check
      _
    $region35: #{tpu_custom_call.1} parent=1 // pred_check_branch
      %134 = sbr.rel (0) target = $region37
    $region36: #{tpu_custom_call.1} parent=1 // pred_region
      _
    $region37: #{tpu_custom_call.1} parent=1 // pred_fallthru
      _
    // Predicated region
    $region38: #{tpu_custom_call.1} parent=1 // pred_check
      _
    $region39: #{tpu_custom_call.1} parent=1 // pred_check_branch
      %136 = sbr.rel (0) target = $region41
    $region40: #{tpu_custom_call.1} parent=1 // pred_region
      %137 = dma.done [#allocation5], 16
    $region41: #{tpu_custom_call.1} parent=1 // pred_fallthru
      _
    %138 = vsyncpa [#allocation4], 1
    %139 = vsyncpa [#allocation7], 1
    %140 = vsyncpa [#allocation5], 1

</llo_original>
